<compile_context>
chip_gen: v7x
topology: tpu7x:2x2x1
jax: 0.10.0
libtpu: 0.0.40
codegen_flags: <defaults>
</compile_context>

<pallas_src>
import functools

import jax
import jax.numpy as jnp
from jax.experimental import pallas as pl
from jax.experimental.pallas import tpu as pltpu

_LANE = 128
_SUBLANE = 8


def _round_up(n, m):
    return (n + m - 1) // m * m


def _erf(x):
    # Abramowitz & Stegun 7.1.26 rational approximation, |abs err| <= 1.5e-7.
    # Used instead of lax.erf so the kernel only relies on exp/mul/add/where.
    a1, a2, a3, a4, a5 = (0.254829592, -0.284496736, 1.421413741,
                          -1.453152027, 1.061405429)
    p = 0.3275911
    ax = jnp.abs(x)
    t = 1.0 / (1.0 + p * ax)
    poly = ((((a5 * t + a4) * t + a3) * t + a2) * t + a1) * t
    y = 1.0 - poly * jnp.exp(-(ax * ax))
    return jnp.where(x >= 0, y, -y)


def _gelu(x, approximate):
    if approximate:
        # tanh form (rides the EUP slot) -- optional fast path for v5e.
        c = 0.7978845608028654  # sqrt(2/pi)
        return 0.5 * x * (1.0 + jnp.tanh(c * (x + 0.044715 * x * x * x)))
    # exact-erf form matching torch.nn.GELU() default.
    return 0.5 * x * (1.0 + _erf(x * 0.7071067811865476))


def _moe_kernel(x_ref, wg_ref, bg_ref, w1_ref, b1_ref, w2_ref, b2_ref,
                gamma_ref, beta_ref, o_ref, acc_ref, gate_ref, *,
                d_real, eps, matmul_dtype, gelu_approximate):
    e = pl.program_id(1)
    n_e = pl.num_programs(1)
    tm, dp = acc_ref.shape
    ep = gate_ref.shape[-1]

    # ---- e == 0: gate softmax (f32, exact division) + accumulator init ----
    @pl.when(e == 0)
    def _():
        x = x_ref[...].astype(jnp.float32)
        logits = jnp.dot(x, wg_ref[...], preferred_element_type=jnp.float32)
        logits = logits + bg_ref[...]           # padded expert cols get -1e30
        m = jnp.max(logits, axis=-1, keepdims=True)
        p = jnp.exp(logits - m)                 # padded cols -> exactly 0
        gate_ref[...] = p / jnp.sum(p, axis=-1, keepdims=True)
        acc_ref[...] = jnp.zeros_like(acc_ref)

    # ---- expert e (streamed): Linear -> GELU -> gate-scaled Linear --------
    # Extract gate column e via mask + lane-reduce (avoids dynamic lane slice).
    col_mask = jax.lax.broadcasted_iota(jnp.int32, (tm, ep), 1) == e
    g = jnp.sum(jnp.where(col_mask, gate_ref[...], 0.0), axis=-1, keepdims=True)

    xb = x_ref[...].astype(matmul_dtype)
    h = jnp.dot(xb, w1_ref[0], preferred_element_type=jnp.float32)
    h = h + b1_ref[0]
    h = _gelu(h, gelu_approximate)
    hg = (h * g).astype(matmul_dtype)           # fold gate before 2nd matmul
    acc_ref[...] += (jnp.dot(hg, w2_ref[0], preferred_element_type=jnp.float32)
                     + g * b2_ref[0])

    # TODO(synk): nn.Dropout is identity in eval mode; training-mode (stateful
    # RNG) dropout is intentionally not implemented here.

    # ---- last expert: residual + LayerNorm(eps) over the real D columns ---
    @pl.when(e == n_e - 1)
    def _():
        y = acc_ref[...] + x_ref[...].astype(jnp.float32)  # padded D cols stay 0
        mean = jnp.sum(y, axis=-1, keepdims=True) * (1.0 / d_real)
        lane_mask = jax.lax.broadcasted_iota(jnp.int32, (tm, dp), 1) < d_real
        diff = jnp.where(lane_mask, y - mean, 0.0)
        var = jnp.sum(diff * diff, axis=-1, keepdims=True) * (1.0 / d_real)
        yhat = (y - mean) * jax.lax.rsqrt(var + eps)
        o_ref[...] = (yhat * gamma_ref[...] + beta_ref[...]).astype(o_ref.dtype)


def prepare_params(params, matmul_dtype=jnp.bfloat16):
    """Pad model dims to lane multiples and cast expert weights ONCE.

    Done outside the per-call hot path (the perf review flagged per-call
    padding as hundreds of MiB of wasted HBM traffic at production sizes).
    """
    E, D, H = params["w1"].shape
    Dp, Hp, Ep = _round_up(D, _LANE), _round_up(H, _LANE), _round_up(E, _LANE)
    f32 = jnp.float32
    prepared = {
        # Gate path stays f32 (feeds a softmax).  -1e30 bias on padded expert
        # columns -> exp() == 0 -> softmax over real experts is unaffected.
        "wg": jnp.zeros((Dp, Ep), f32).at[:D, :E].set(params["wg"].astype(f32)),
        "bg": jnp.full((1, Ep), -1e30, f32).at[0, :E].set(params["bg"].astype(f32)),
        # Expert weights in matmul dtype (bf16 default); biases kept f32 and
        # stored (E, 1, *) so the per-expert block keeps full trailing dims.
        "w1": jnp.zeros((E, Dp, Hp), matmul_dtype).at[:, :D, :H].set(
            params["w1"].astype(matmul_dtype)),
        "b1": jnp.zeros((E, 1, Hp), f32).at[:, 0, :H].set(params["b1"].astype(f32)),
        "w2": jnp.zeros((E, Hp, Dp), matmul_dtype).at[:, :H, :D].set(
            params["w2"].astype(matmul_dtype)),
        "b2": jnp.zeros((E, 1, Dp), f32).at[:, 0, :D].set(params["b2"].astype(f32)),
        "gamma": jnp.zeros((1, Dp), f32).at[0, :D].set(params["gamma"].astype(f32)),
        "beta": jnp.zeros((1, Dp), f32).at[0, :D].set(params["beta"].astype(f32)),
    }
    meta = {"d_model": D, "n_experts": E, "hidden": H,
            "Dp": Dp, "Hp": Hp, "Ep": Ep, "matmul_dtype": matmul_dtype}
    return prepared, meta


def moe_forward(x, prepared, meta, *, tm=512, gelu_approximate=False):
    """x: (B, L, D) float32. prepared/meta from prepare_params()."""
    B, L, D = x.shape
    assert D == meta["d_model"]
    E, Dp, Hp, Ep = meta["n_experts"], meta["Dp"], meta["Hp"], meta["Ep"]
    matmul_dtype = meta["matmul_dtype"]

    BL = B * L
    # Adaptive tile size: don't pad tiny batches up to a huge tile.
    tm = max(_SUBLANE, min(tm, _round_up(BL, _SUBLANE)))
    BLp = _round_up(BL, tm)

    f32 = jnp.float32
    x_flat = x.reshape(BL, D).astype(f32)
    if BLp == BL and Dp == D:
        x2 = x_flat                       # no pad copy needed
    else:
        x2 = jnp.zeros((BLp, Dp), f32).at[:BL, :D].set(x_flat)

    kernel = functools.partial(
        _moe_kernel, d_real=D, eps=1e-12, matmul_dtype=matmul_dtype,
        gelu_approximate=gelu_approximate)

    # Grid-invariant operands: constant index_map -> no re-DMA across steps.
    inv = lambda shape: pl.BlockSpec(shape, lambda i, e, _s=len(shape): (0,) * _s)

    out = pl.pallas_call(
        kernel,
        out_shape=jax.ShapeDtypeStruct((BLp, Dp), x.dtype),
        grid_spec=pltpu.PrefetchScalarGridSpec(
            num_scalar_prefetch=0,
            grid=(BLp // tm, E),                                 # experts inner
            in_specs=[
                pl.BlockSpec((tm, Dp), lambda i, e: (i, 0)),     # x (resident over e)
                inv((Dp, Ep)),                                   # Wg
                inv((1, Ep)),                                    # bg
                pl.BlockSpec((1, Dp, Hp), lambda i, e: (e, 0, 0)),  # W1[e] streamed
                pl.BlockSpec((1, 1, Hp), lambda i, e: (e, 0, 0)),   # b1[e]
                pl.BlockSpec((1, Hp, Dp), lambda i, e: (e, 0, 0)),  # W2[e] streamed
                pl.BlockSpec((1, 1, Dp), lambda i, e: (e, 0, 0)),   # b2[e]
                inv((1, Dp)),                                    # gamma
                inv((1, Dp)),                                    # beta
            ],
            out_specs=pl.BlockSpec((tm, Dp), lambda i, e: (i, 0)),
            scratch_shapes=[
                pltpu.VMEM((tm, Dp), jnp.float32),   # expert-sum accumulator
                pltpu.VMEM((tm, Ep), jnp.float32),   # gate softmax stash
            ]),
        compiler_params=pltpu.CompilerParams(
            dimension_semantics=("parallel", "arbitrary"),
            # Budgeted for v7x's 64 MiB/TC (also fine on v5e/v6e 128 MiB):
            # tm<=512 x/out/acc buffers + one double-buffered expert fit.
            vmem_limit_bytes=48 * 1024 * 1024),
    )(x2, prepared["wg"], prepared["bg"], prepared["w1"], prepared["b1"],
      prepared["w2"], prepared["b2"], prepared["gamma"], prepared["beta"])

    return out[:BL, :D].reshape(B, L, D)


def init_params(key, d_model, n_experts, expert_hidden):
    """Deterministic init mimicking nn.Linear's uniform(-1/sqrt(fan_in), ...)."""
    ks = jax.random.split(key, 8)
    u = lambda k, shape, fan_in: jax.random.uniform(
        k, shape, jnp.float32, -1.0 / jnp.sqrt(fan_in), 1.0 / jnp.sqrt(fan_in))
    return {
        "wg": u(ks[0], (d_model, n_experts), d_model),
        "bg": u(ks[1], (n_experts,), d_model),
        "w1": u(ks[2], (n_experts, d_model, expert_hidden), d_model),
        "b1": u(ks[3], (n_experts, expert_hidden), d_model),
        "w2": u(ks[4], (n_experts, expert_hidden, d_model), expert_hidden),
        "b2": u(ks[5], (n_experts, d_model), expert_hidden),
        "gamma": jnp.ones((d_model,), jnp.float32),
        "beta": jnp.zeros((d_model,), jnp.float32),
    }


def moe_reference(x, params):
    """Plain-JAX reference matching the PyTorch forward (eval mode), f32."""
    hi = jax.lax.Precision.HIGHEST
    logits = jnp.einsum("bld,dn->bln", x, params["wg"], precision=hi) + params["bg"]
    gate = jax.nn.softmax(logits, axis=-1)                       # (B,L,N)
    h = jnp.einsum("bld,ndh->blnh", x, params["w1"], precision=hi) + params["b1"]
    h = jax.nn.gelu(h, approximate=False)
    eo = jnp.einsum("blnh,nhd->blnd", h, params["w2"], precision=hi) + params["b2"]
    mix = jnp.einsum("blnd,bln->bld", eo, gate, precision=hi)
    y = mix + x
    mean = jnp.mean(y, axis=-1, keepdims=True)
    var = jnp.mean((y - mean) ** 2, axis=-1, keepdims=True)
    return (y - mean) * jax.lax.rsqrt(var + 1e-12) * params["gamma"] + params["beta"]


if __name__ == "__main__":
    B, L, D = 2, 8, 32
    n_experts, expert_hidden = 4, 64

    key = jax.random.PRNGKey(0)
    kx, kp = jax.random.split(key)
    x = jax.random.normal(kx, (B, L, D), jnp.float32)
    params = init_params(kp, D, n_experts, expert_hidden)

    ref = moe_reference(x, params)

    # f32-matmul path: tightened tolerance (perf-review correctness note);
    # margin left for MXU multi-pass f32 vs XLA HIGHEST rounding + erf poly.
    prep32, meta32 = prepare_params(params, matmul_dtype=jnp.float32)
    out_f32 = jax.block_until_ready(moe_forward(x, prep32, meta32))
    assert out_f32.shape == (B, L, D)
    assert jnp.allclose(out_f32, ref, atol=1e-4, rtol=1e-4), "f32 mismatch"

    # bf16-matmul path (default, MXU-native): looser tolerance per bf16 rounding.
    prep16, meta16 = prepare_params(params, matmul_dtype=jnp.bfloat16)
    out_bf16 = jax.block_until_ready(moe_forward(x, prep16, meta16))
    assert out_bf16.shape == (B, L, D)
    assert jnp.allclose(out_bf16, ref, atol=3e-2, rtol=3e-2), "bf16 mismatch"

    print("KERNEL_OK")
</pallas_src>

<mosaic_0001>
module attributes {stable_mosaic.version = 11 : i64} {
  func.func @_moe_kernel(%arg0: i32, %arg1: i32, %arg2: memref<16x128xf32, #tpu.memory_space<vmem>>, %arg3: memref<128x128xf32, #tpu.memory_space<vmem>>, %arg4: memref<1x128xf32, #tpu.memory_space<vmem>>, %arg5: memref<1x128x128xf32, #tpu.memory_space<vmem>>, %arg6: memref<1x1x128xf32, #tpu.memory_space<vmem>>, %arg7: memref<1x128x128xf32, #tpu.memory_space<vmem>>, %arg8: memref<1x1x128xf32, #tpu.memory_space<vmem>>, %arg9: memref<1x128xf32, #tpu.memory_space<vmem>>, %arg10: memref<1x128xf32, #tpu.memory_space<vmem>>, %arg11: memref<16x128xf32, #tpu.memory_space<vmem>>, %arg12: memref<16x128xf32, #tpu.memory_space<vmem>>, %arg13: memref<16x128xf32, #tpu.memory_space<vmem>>) attributes {dimension_semantics = [#tpu.dimension_semantics<parallel>, #tpu.dimension_semantics<arbitrary>], iteration_bounds = array<i64: 1, 4>, scalar_prefetch = 0 : i64, scratch_operands = 2 : i64, tpu.core_type = #tpu.core_type<tc>, window_params = [{transform_indices = @transform_0, window_bounds = array<i64: 16, 128>}, {pipeline_mode = #tpu.pipeline_mode<synchronous>, transform_indices = @transform_1, window_bounds = array<i64: 128, 128>}, {pipeline_mode = #tpu.pipeline_mode<synchronous>, transform_indices = @transform_2, window_bounds = array<i64: 1, 128>}, {transform_indices = @transform_3, window_bounds = array<i64: 1, 128, 128>}, {transform_indices = @transform_4, window_bounds = array<i64: 1, 1, 128>}, {transform_indices = @transform_5, window_bounds = array<i64: 1, 128, 128>}, {transform_indices = @transform_6, window_bounds = array<i64: 1, 1, 128>}, {pipeline_mode = #tpu.pipeline_mode<synchronous>, transform_indices = @transform_7, window_bounds = array<i64: 1, 128>}, {pipeline_mode = #tpu.pipeline_mode<synchronous>, transform_indices = @transform_8, window_bounds = array<i64: 1, 128>}, {transform_indices = @transform_9, window_bounds = array<i64: 16, 128>}]} {
    %c0_i32 = arith.constant 0 : i32
    %0 = arith.cmpi eq, %arg1, %c0_i32 : i32
    %1 = arith.extui %0 : i1 to i32
    %c0_i32_0 = arith.constant 0 : i32
    %2 = arith.cmpi ne, %1, %c0_i32_0 : i32
    scf.if %2 {
      %c0_39 = arith.constant 0 : index
      %c0_40 = arith.constant 0 : index
      %76 = vector.load %arg2[%c0_39, %c0_40] : memref<16x128xf32, #tpu.memory_space<vmem>>, vector<16x128xf32>
      %c0_41 = arith.constant 0 : index
      %c0_42 = arith.constant 0 : index
      %77 = vector.load %arg3[%c0_41, %c0_42] : memref<128x128xf32, #tpu.memory_space<vmem>>, vector<128x128xf32>
      %cst_43 = arith.constant dense<0.000000e+00> : vector<16x128xf32>
      %78 = tpu.matmul %76, %77, %cst_43 {dimension_numbers = #tpu.dot_dimension_numbers<[1], [0], [0], [1], [0, 0, 1, 1], [], []>} : vector<16x128xf32>, vector<128x128xf32>, vector<16x128xf32> -> vector<16x128xf32>
      %c0_44 = arith.constant 0 : index
      %c0_45 = arith.constant 0 : index
      %79 = vector.load %arg4[%c0_44, %c0_45] : memref<1x128xf32, #tpu.memory_space<vmem>>, vector<1x128xf32>
      %80 = vector.broadcast %79 : vector<1x128xf32> to vector<16x128xf32>
      %81 = arith.addf %78, %80 : vector<16x128xf32>
      %cst_46 = arith.constant dense<0xFF800000> : vector<16xf32>
      %82 = vector.multi_reduction <maximumf>, %81, %cst_46 [1] : vector<16x128xf32> to vector<16xf32>
      %83 = vector.shape_cast %82 : vector<16xf32> to vector<16x1xf32>
      %84 = vector.broadcast %83 : vector<16x1xf32> to vector<16x128xf32>
      %85 = arith.subf %81, %84 : vector<16x128xf32>
      %86 = math.exp %85 : vector<16x128xf32>
      %cst_47 = arith.constant dense<0.000000e+00> : vector<16xf32>
      %87 = vector.multi_reduction <add>, %86, %cst_47 [1] : vector<16x128xf32> to vector<16xf32>
      %88 = vector.shape_cast %87 : vector<16xf32> to vector<16x1xf32>
      %89 = vector.broadcast %88 : vector<16x1xf32> to vector<16x128xf32>
      %90 = arith.divf %86, %89 : vector<16x128xf32>
      %c0_48 = arith.constant 0 : index
      %c0_49 = arith.constant 0 : index
      %91 = vector.load %arg13[%c0_48, %c0_49] : memref<16x128xf32, #tpu.memory_space<vmem>>, vector<16x128xf32>
      tpu.vector_store %arg13[%c0_48, %c0_49], %90 {strides = array<i32>} : memref<16x128xf32, #tpu.memory_space<vmem>>, vector<16x128xf32>,
      %cst_50 = arith.constant 0.000000e+00 : f32
      %92 = vector.broadcast %cst_50 : f32 to vector<16x128xf32>
      %c0_51 = arith.constant 0 : index
      %c0_52 = arith.constant 0 : index
      %93 = vector.load %arg12[%c0_51, %c0_52] : memref<16x128xf32, #tpu.memory_space<vmem>>, vector<16x128xf32>
      tpu.vector_store %arg12[%c0_51, %c0_52], %92 {strides = array<i32>} : memref<16x128xf32, #tpu.memory_space<vmem>>, vector<16x128xf32>,
    } else {
    }
    %3 = tpu.iota {dimensions = array<i32: 1>} : vector<16x128xi32>
    %4 = vector.broadcast %arg1 : i32 to vector<16x128xi32>
    %5 = arith.cmpi eq, %3, %4 : vector<16x128xi32>
    %c0 = arith.constant 0 : index
    %c0_1 = arith.constant 0 : index
    %6 = vector.load %arg13[%c0, %c0_1] : memref<16x128xf32, #tpu.memory_space<vmem>>, vector<16x128xf32>
    %cst = arith.constant 0.000000e+00 : f32
    %7 = vector.broadcast %cst : f32 to vector<16x128xf32>
    %8 = arith.select %5, %6, %7 : vector<16x128xi1>, vector<16x128xf32>
    %cst_2 = arith.constant dense<0.000000e+00> : vector<16xf32>
    %9 = vector.multi_reduction <add>, %8, %cst_2 [1] : vector<16x128xf32> to vector<16xf32>
    %10 = vector.shape_cast %9 : vector<16xf32> to vector<16x1xf32>
    %c0_3 = arith.constant 0 : index
    %c0_4 = arith.constant 0 : index
    %11 = vector.load %arg2[%c0_3, %c0_4] : memref<16x128xf32, #tpu.memory_space<vmem>>, vector<16x128xf32>
    %c0_5 = arith.constant 0 : index
    %c0_6 = arith.constant 0 : index
    %c0_7 = arith.constant 0 : index
    %12 = vector.load %arg5[%c0_5, %c0_6, %c0_7] : memref<1x128x128xf32, #tpu.memory_space<vmem>>, vector<1x128x128xf32>
    %13 = vector.shape_cast %12 : vector<1x128x128xf32> to vector<128x128xf32>
    %cst_8 = arith.constant dense<0.000000e+00> : vector<16x128xf32>
    %14 = tpu.matmul %11, %13, %cst_8 {dimension_numbers = #tpu.dot_dimension_numbers<[1], [0], [0], [1], [0, 0, 1, 1], [], []>} : vector<16x128xf32>, vector<128x128xf32>, vector<16x128xf32> -> vector<16x128xf32>
    %c0_9 = arith.constant 0 : index
    %c0_10 = arith.constant 0 : index
    %c0_11 = arith.constant 0 : index
    %15 = vector.load %arg6[%c0_9, %c0_10, %c0_11] : memref<1x1x128xf32, #tpu.memory_space<vmem>>, vector<1x1x128xf32>
    %16 = vector.shape_cast %15 : vector<1x1x128xf32> to vector<1x128xf32>
    %17 = vector.broadcast %16 : vector<1x128xf32> to vector<16x128xf32>
    %18 = arith.addf %14, %17 : vector<16x128xf32>
    %cst_12 = arith.constant 5.000000e-01 : f32
    %19 = vector.broadcast %cst_12 : f32 to vector<16x128xf32>
    %20 = arith.mulf %19, %18 : vector<16x128xf32>
    %cst_13 = arith.constant 0.707106769 : f32
    %21 = vector.broadcast %cst_13 : f32 to vector<16x128xf32>
    %22 = arith.mulf %18, %21 : vector<16x128xf32>
    %23 = math.absf %22 : vector<16x128xf32>
    %cst_14 = arith.constant 0.327591091 : f32
    %24 = vector.broadcast %cst_14 : f32 to vector<16x128xf32>
    %25 = arith.mulf %24, %23 : vector<16x128xf32>
    %cst_15 = arith.constant 1.000000e+00 : f32
    %26 = vector.broadcast %cst_15 : f32 to vector<16x128xf32>
    %27 = arith.addf %26, %25 : vector<16x128xf32>
    %cst_16 = arith.constant 1.000000e+00 : f32
    %28 = vector.broadcast %cst_16 : f32 to vector<16x128xf32>
    %29 = arith.divf %28, %27 : vector<16x128xf32>
    %cst_17 = arith.constant 1.06140542 : f32
    %30 = vector.broadcast %cst_17 : f32 to vector<16x128xf32>
    %31 = arith.mulf %30, %29 : vector<16x128xf32>
    %cst_18 = arith.constant -1.45315206 : f32
    %32 = vector.broadcast %cst_18 : f32 to vector<16x128xf32>
    %33 = arith.addf %31, %32 : vector<16x128xf32>
    %34 = arith.mulf %33, %29 : vector<16x128xf32>
    %cst_19 = arith.constant 1.42141378 : f32
    %35 = vector.broadcast %cst_19 : f32 to vector<16x128xf32>
    %36 = arith.addf %34, %35 : vector<16x128xf32>
    %37 = arith.mulf %36, %29 : vector<16x128xf32>
    %cst_20 = arith.constant -0.284496725 : f32
    %38 = vector.broadcast %cst_20 : f32 to vector<16x128xf32>
    %39 = arith.addf %37, %38 : vector<16x128xf32>
    %40 = arith.mulf %39, %29 : vector<16x128xf32>
    %cst_21 = arith.constant 0.254829586 : f32
    %41 = vector.broadcast %cst_21 : f32 to vector<16x128xf32>
    %42 = arith.addf %40, %41 : vector<16x128xf32>
    %43 = arith.mulf %42, %29 : vector<16x128xf32>
    %44 = arith.mulf %23, %23 : vector<16x128xf32>
    %cst_22 = arith.constant 0.000000e+00 : f32
    %45 = vector.broadcast %cst_22 : f32 to vector<16x128xf32>
    %46 = arith.subf %45, %44 : vector<16x128xf32>
    %47 = math.exp %46 : vector<16x128xf32>
    %48 = arith.mulf %43, %47 : vector<16x128xf32>
    %cst_23 = arith.constant 1.000000e+00 : f32
    %49 = vector.broadcast %cst_23 : f32 to vector<16x128xf32>
    %50 = arith.subf %49, %48 : vector<16x128xf32>
    %cst_24 = arith.constant 0.000000e+00 : f32
    %51 = vector.broadcast %cst_24 : f32 to vector<16x128xf32>
    %52 = arith.cmpf oge, %22, %51 : vector<16x128xf32>
    %cst_25 = arith.constant 0.000000e+00 : f32
    %53 = vector.broadcast %cst_25 : f32 to vector<16x128xf32>
    %54 = arith.subf %53, %50 : vector<16x128xf32>
    %55 = arith.select %52, %50, %54 : vector<16x128xi1>, vector<16x128xf32>
    %cst_26 = arith.constant 1.000000e+00 : f32
    %56 = vector.broadcast %cst_26 : f32 to vector<16x128xf32>
    %57 = arith.addf %56, %55 : vector<16x128xf32>
    %58 = arith.mulf %20, %57 : vector<16x128xf32>
    %59 = vector.broadcast %10 : vector<16x1xf32> to vector<16x128xf32>
    %60 = arith.mulf %58, %59 : vector<16x128xf32>
    %c0_27 = arith.constant 0 : index
    %c0_28 = arith.constant 0 : index
    %61 = vector.load %arg12[%c0_27, %c0_28] : memref<16x128xf32, #tpu.memory_space<vmem>>, vector<16x128xf32>
    %c0_29 = arith.constant 0 : index
    %c0_30 = arith.constant 0 : index
    %c0_31 = arith.constant 0 : index
    %62 = vector.load %arg7[%c0_29, %c0_30, %c0_31] : memref<1x128x128xf32, #tpu.memory_space<vmem>>, vector<1x128x128xf32>
    %63 = vector.shape_cast %62 : vector<1x128x128xf32> to vector<128x128xf32>
    %cst_32 = arith.constant dense<0.000000e+00> : vector<16x128xf32>
    %64 = tpu.matmul %60, %63, %cst_32 {dimension_numbers = #tpu.dot_dimension_numbers<[1], [0], [0], [1], [0, 0, 1, 1], [], []>} : vector<16x128xf32>, vector<128x128xf32>, vector<16x128xf32> -> vector<16x128xf32>
    %c0_33 = arith.constant 0 : index
    %c0_34 = arith.constant 0 : index
    %c0_35 = arith.constant 0 : index
    %65 = vector.load %arg8[%c0_33, %c0_34, %c0_35] : memref<1x1x128xf32, #tpu.memory_space<vmem>>, vector<1x1x128xf32>
    %66 = vector.shape_cast %65 : vector<1x1x128xf32> to vector<1x128xf32>
    %67 = vector.broadcast %10 : vector<16x1xf32> to vector<16x128xf32>
    %68 = vector.broadcast %66 : vector<1x128xf32> to vector<16x128xf32>
    %69 = arith.mulf %67, %68 : vector<16x128xf32>
    %70 = arith.addf %64, %69 : vector<16x128xf32>
    %71 = arith.addf %61, %70 : vector<16x128xf32>
    %c0_36 = arith.constant 0 : index
    %c0_37 = arith.constant 0 : index
    %72 = vector.load %arg12[%c0_36, %c0_37] : memref<16x128xf32, #tpu.memory_space<vmem>>, vector<16x128xf32>
    tpu.vector_store %arg12[%c0_36, %c0_37], %71 {strides = array<i32>} : memref<16x128xf32, #tpu.memory_space<vmem>>, vector<16x128xf32>,
    %c3_i32 = arith.constant 3 : i32
    %73 = arith.cmpi eq, %arg1, %c3_i32 : i32
    %74 = arith.extui %73 : i1 to i32
    %c0_i32_38 = arith.constant 0 : i32
    %75 = arith.cmpi ne, %74, %c0_i32_38 : i32
    scf.if %75 {
      %c0_39 = arith.constant 0 : index
      %c0_40 = arith.constant 0 : index
      %76 = vector.load %arg12[%c0_39, %c0_40] : memref<16x128xf32, #tpu.memory_space<vmem>>, vector<16x128xf32>
      %c0_41 = arith.constant 0 : index
      %c0_42 = arith.constant 0 : index
      %77 = vector.load %arg2[%c0_41, %c0_42] : memref<16x128xf32, #tpu.memory_space<vmem>>, vector<16x128xf32>
      %78 = arith.addf %76, %77 : vector<16x128xf32>
      %cst_43 = arith.constant dense<0.000000e+00> : vector<16xf32>
      %79 = vector.multi_reduction <add>, %78, %cst_43 [1] : vector<16x128xf32> to vector<16xf32>
      %80 = vector.shape_cast %79 : vector<16xf32> to vector<16x1xf32>
      %cst_44 = arith.constant 3.125000e-02 : f32
      %81 = vector.broadcast %cst_44 : f32 to vector<16x1xf32>
      %82 = arith.mulf %80, %81 : vector<16x1xf32>
      %83 = tpu.iota {dimensions = array<i32: 1>} : vector<16x128xi32>
      %c32_i32 = arith.constant 32 : i32
      %84 = vector.broadcast %c32_i32 : i32 to vector<16x128xi32>
      %85 = arith.cmpi slt, %83, %84 : vector<16x128xi32>
      %86 = vector.broadcast %82 : vector<16x1xf32> to vector<16x128xf32>
      %87 = arith.subf %78, %86 : vector<16x128xf32>
      %cst_45 = arith.constant 0.000000e+00 : f32
      %88 = vector.broadcast %cst_45 : f32 to vector<16x128xf32>
      %89 = arith.select %85, %87, %88 : vector<16x128xi1>, vector<16x128xf32>
      %90 = arith.mulf %89, %89 : vector<16x128xf32>
      %cst_46 = arith.constant dense<0.000000e+00> : vector<16xf32>
      %91 = vector.multi_reduction <add>, %90, %cst_46 [1] : vector<16x128xf32> to vector<16xf32>
      %92 = vector.shape_cast %91 : vector<16xf32> to vector<16x1xf32>
      %cst_47 = arith.constant 3.125000e-02 : f32
      %93 = vector.broadcast %cst_47 : f32 to vector<16x1xf32>
      %94 = arith.mulf %92, %93 : vector<16x1xf32>
      %95 = vector.broadcast %82 : vector<16x1xf32> to vector<16x128xf32>
      %96 = arith.subf %78, %95 : vector<16x128xf32>
      %cst_48 = arith.constant 9.99999996E-13 : f32
      %97 = vector.broadcast %cst_48 : f32 to vector<16x1xf32>
      %98 = arith.addf %94, %97 : vector<16x1xf32>
      %99 = math.rsqrt %98 : vector<16x1xf32>
      %100 = vector.broadcast %99 : vector<16x1xf32> to vector<16x128xf32>
      %101 = arith.mulf %96, %100 : vector<16x128xf32>
      %c0_49 = arith.constant 0 : index
      %c0_50 = arith.constant 0 : index
      %102 = vector.load %arg9[%c0_49, %c0_50] : memref<1x128xf32, #tpu.memory_space<vmem>>, vector<1x128xf32>
      %103 = vector.broadcast %102 : vector<1x128xf32> to vector<16x128xf32>
      %104 = arith.mulf %101, %103 : vector<16x128xf32>
      %c0_51 = arith.constant 0 : index
      %c0_52 = arith.constant 0 : index
      %105 = vector.load %arg10[%c0_51, %c0_52] : memref<1x128xf32, #tpu.memory_space<vmem>>, vector<1x128xf32>
      %106 = vector.broadcast %105 : vector<1x128xf32> to vector<16x128xf32>
      %107 = arith.addf %104, %106 : vector<16x128xf32>
      %c0_53 = arith.constant 0 : index
      %c0_54 = arith.constant 0 : index
      %108 = vector.load %arg11[%c0_53, %c0_54] : memref<16x128xf32, #tpu.memory_space<vmem>>, vector<16x128xf32>
      tpu.vector_store %arg11[%c0_53, %c0_54], %107 {strides = array<i32>} : memref<16x128xf32, #tpu.memory_space<vmem>>, vector<16x128xf32>,
    } else {
    }
    return
  }
  func.func @transform_0(%arg0: i32, %arg1: i32) -> (i32, i32) {
    %c0_i32 = arith.constant 0 : i32
    %c0_i32_0 = arith.constant 0 : i32
    return %arg0, %c0_i32 : i32, i32
  }
  func.func @transform_1(%arg0: i32, %arg1: i32) -> (i32, i32) {
    %c0_i32 = arith.constant 0 : i32
    %c0_i32_0 = arith.constant 0 : i32
    %c0_i32_1 = arith.constant 0 : i32
    return %c0_i32, %c0_i32_0 : i32, i32
  }
  func.func @transform_2(%arg0: i32, %arg1: i32) -> (i32, i32) {
    %c0_i32 = arith.constant 0 : i32
    %c0_i32_0 = arith.constant 0 : i32
    %c0_i32_1 = arith.constant 0 : i32
    return %c0_i32, %c0_i32_0 : i32, i32
  }
  func.func @transform_3(%arg0: i32, %arg1: i32) -> (i32, i32, i32) {
    %c0_i32 = arith.constant 0 : i32
    %c0_i32_0 = arith.constant 0 : i32
    %c0_i32_1 = arith.constant 0 : i32
    return %arg1, %c0_i32, %c0_i32_0 : i32, i32, i32
  }
  func.func @transform_4(%arg0: i32, %arg1: i32) -> (i32, i32, i32) {
    %c0_i32 = arith.constant 0 : i32
    %c0_i32_0 = arith.constant 0 : i32
    %c0_i32_1 = arith.constant 0 : i32
    return %arg1, %c0_i32, %c0_i32_0 : i32, i32, i32
  }
  func.func @transform_5(%arg0: i32, %arg1: i32) -> (i32, i32, i32) {
    %c0_i32 = arith.constant 0 : i32
    %c0_i32_0 = arith.constant 0 : i32
    %c0_i32_1 = arith.constant 0 : i32
    return %arg1, %c0_i32, %c0_i32_0 : i32, i32, i32
  }
  func.func @transform_6(%arg0: i32, %arg1: i32) -> (i32, i32, i32) {
    %c0_i32 = arith.constant 0 : i32
    %c0_i32_0 = arith.constant 0 : i32
    %c0_i32_1 = arith.constant 0 : i32
    return %arg1, %c0_i32, %c0_i32_0 : i32, i32, i32
  }
  func.func @transform_7(%arg0: i32, %arg1: i32) -> (i32, i32) {
    %c0_i32 = arith.constant 0 : i32
    %c0_i32_0 = arith.constant 0 : i32
    %c0_i32_1 = arith.constant 0 : i32
    return %c0_i32, %c0_i32_0 : i32, i32
  }
  func.func @transform_8(%arg0: i32, %arg1: i32) -> (i32, i32) {
    %c0_i32 = arith.constant 0 : i32
    %c0_i32_0 = arith.constant 0 : i32
    %c0_i32_1 = arith.constant 0 : i32
    return %c0_i32, %c0_i32_0 : i32, i32
  }
  func.func @transform_9(%arg0: i32, %arg1: i32) -> (i32, i32) {
    %c0_i32 = arith.constant 0 : i32
    %c0_i32_0 = arith.constant 0 : i32
    return %arg0, %c0_i32 : i32, i32
  }
}

</mosaic_0001>

<llo_original>
// kernel: tpu_custom_call.1
$region0: #{tpu_custom_call.1}
  #allocation0 [shape = 'u32[]', space=smem, size = 0x4, offset = 0x4, fixed_abs, tag = 'smem constant byte address 0x4 - core index']
  #allocation1 [shape = 'u32[144,128]{1,0:T(1,128)}', space=vmem, size = 0x12000, scoped, tag = 'internal scratch']
  #allocation2 [shape = 'f32[16,128]{1,0:T(8,128)}', space=vmem, size = 0x2000, scoped, tag = 'scratch operand']
  #allocation3 [shape = 'f32[16,128]{1,0:T(8,128)}', space=vmem, size = 0x2000, scoped, tag = 'scratch operand']
  %s0 = inlined_call_operand.hbm [shape: f32[16,128], index: 0, kind: input, shape index: {}]
  %s1 = inlined_call_operand.hbm [shape: f32[128,128], index: 1, kind: input, shape index: {}]
  %s2 = inlined_call_operand.vmem [shape: f32[1,128], index: 2, kind: input, shape index: {}]
  %s3 = inlined_call_operand.hbm [shape: f32[4,128,128], index: 3, kind: input, shape index: {}]
  %s4 = inlined_call_operand.vmem [shape: f32[4,1,128], index: 4, kind: input, shape index: {}]
  %s5 = inlined_call_operand.hbm [shape: f32[4,128,128], index: 5, kind: input, shape index: {}]
  %s6 = inlined_call_operand.vmem [shape: f32[4,1,128], index: 6, kind: input, shape index: {}]
  %s7 = inlined_call_operand.vmem [shape: f32[1,128], index: 7, kind: input, shape index: {}]
  %s8 = inlined_call_operand.vmem [shape: f32[1,128], index: 8, kind: input, shape index: {}]
  %s9 = inlined_call_operand.hbm [shape: f32[16,128], index: 9, kind: output, shape index: {}]
  %s10 = sld [smem:[#allocation0]]
  $region93: #{tpu_custom_call.1} parent=0
    _
  %s12 = ssub.s32 1, %s10
  %s13 = scalar_select 0, %s12, %s10
  $region1: #{tpu_custom_call.1} parent=0
    #allocation4 [shape = 'u8[8192]{0}', space=vmem, size = 0x2000, scoped, tag = 'input window, operand 0, single buffered']
    #allocation5 [shape = 's32[2]{0}', space=sflag, size = 0x8, scoped, tag = 'scoped memory for tpu_custom_call.1']
    #allocation6 [shape = 's32[2]{0}', space=sflag, size = 0x8, scoped, tag = 'scoped memory for tpu_custom_call.1']
    #allocation7 [shape = 'u8[65536]{0}', space=vmem, size = 0x10000, scoped, tag = 'input window, operand 1, single buffered']
    #allocation8 [shape = 's32[1]{0}', space=sflag, size = 0x4, scoped, tag = 'scoped memory for tpu_custom_call.1']
    #allocation9 [shape = 'u8[131072]{0}', space=vmem, size = 0x20000, scoped, tag = 'input window, operand 3']
    #allocation10 [shape = 'u8[131072]{0}', space=vmem, size = 0x20000, scoped, tag = 'input window, operand 5']
    #allocation11 [shape = 'u8[8192]{0}', space=vmem, size = 0x2000, scoped, tag = 'output window, operand 0, single buffered']
    %14 = vsyncpa [#allocation5], 0
    %15 = vsyncpa [#allocation8], 0
    %16 = vsyncpa [#allocation6], 0
    loop: start=0, step=1, limit=6
    $region2: #{tpu_custom_call.1} parent=1 // loop_pre_header
      _
    $region3: #{tpu_custom_call.1} parent=1 // loop_header
      %s18 = sphi 0, %s22
      %p19 = scmp.ge.s32.totalorder %s18, 6
      %s25 = sphi 0, %s37
      %s26 = sphi 0, %s33
      %s27 = sphi 0, %s25
      %s28 = sphi 0, %s26
      %s29 = sphi 0, %s27
      %s30 = sphi 0, %s28
      %s40 = sphi 0, %s42
      %s43 = sphi 0, %s40
      %s44 = sphi 0, %s43
      %s60 = sphi 0, %s44
      %s64 = sphi 0, %s64
      %s66 = sphi 0, %s64
      %s67 = sphi 0, %s66
      %s81 = sphi 0, %s67
      %s85 = sphi 0, %s85
      %s87 = sphi 0, %s85
      %s88 = sphi 0, %s87
      %s102 = sphi 0, %s88
      %s108 = sphi 0, %s110
      %s111 = sphi 0, %s108
      %s112 = sphi 0, %s111
      %s128 = sphi 0, %s112
      %s134 = sphi 0, %s136
      %s137 = sphi 0, %s134
      %s138 = sphi 0, %s137
      %s154 = sphi 0, %s138
      %s160 = sphi 0, %s162
      %s163 = sphi 0, %s160
      %s164 = sphi 0, %s163
      %s180 = sphi 0, %s164
      %s186 = sphi 0, %s188
      %s189 = sphi 0, %s186
      %s190 = sphi 0, %s189
      %s206 = sphi 0, %s190
      %s210 = sphi 0, %s210
      %s212 = sphi 0, %s210
      %s213 = sphi 0, %s212
      %s227 = sphi 0, %s213
      %s231 = sphi 0, %s231
      %s233 = sphi 0, %s231
      %s234 = sphi 0, %s233
      %s248 = sphi 0, %s234
      %s254 = sphi 0, %s256
      %s257 = sphi 0, %s254
      %s258 = sphi 0, %s257
      %s274 = sphi 0, %s258
    $region4: #{tpu_custom_call.1} parent=1 // loop_header_branch
      %21 = sbr.rel (%p19) target = $region8
    $region5: #{tpu_custom_call.1} parent=1 // loop_body
      %s23 = ssub.s32 %s18, 1
      %s24 = ssub.s32 %s18, 2
      %s31 = sadd.s32 1, %s26
      %p32 = scmp.ge.s32.totalorder %s31, 4
      %s33 = scalar_select %p32, 0, %s31
      %s34 = sadd.s32 1, %s25
      %s35 = scalar_select %p32, %s34, %s25
      %p36 = scmp.ge.s32.totalorder %s35, 1
      %s37 = scalar_select %p36, 0, %s35
      %s38 = ssub.s32 %s25, %s37
      %p39 = scmp.eq.s32.totalorder %s38, 0
      %s41 = sadd.s32 %s40, 1
      %s42 = scalar_select %p39, %s40, %s41
      %p45 = pneg %p39
      %p46 = scmp.eq.s32.totalorder %s18, 3
      %p47 = por %p45, %p46
      %p48 = scmp.ne.s32.totalorder %s40, %s43
      %p49 = scmp.eq.s32.totalorder %s18, 0
      %p50 = por %p48, %p49
      %p51 = scmp.ne.s32.totalorder %s40, %s43
      %p52 = scmp.eq.s32.totalorder %s23, 3
      %p53 = por %p51, %p52
      %p54 = scmp.ne.s32.totalorder %s43, %s44
      %p55 = scmp.eq.s32.totalorder %s23, 0
      %p56 = por %p54, %p55
      %p57 = scmp.ne.s32.totalorder %s43, %s44
      %p58 = scmp.eq.s32.totalorder %s24, 3
      %p59 = por %p57, %p58
      %p61 = scmp.ne.s32.totalorder %s44, %s60
      %p62 = scmp.eq.s32.totalorder %s24, 0
      %p63 = por %p61, %p62
      %s65 = sadd.s32 %s64, 1
      %p68 = scmp.eq.s32.totalorder %s18, 3
      %p69 = scmp.ne.s32.totalorder %s64, %s66
      %p70 = scmp.eq.s32.totalorder %s18, 0
      %p71 = por %p69, %p70
      %p72 = scmp.ne.s32.totalorder %s64, %s66
      %p73 = scmp.eq.s32.totalorder %s23, 3
      %p74 = por %p72, %p73
      %p75 = scmp.ne.s32.totalorder %s66, %s67
      %p76 = scmp.eq.s32.totalorder %s23, 0
      %p77 = por %p75, %p76
      %p78 = scmp.ne.s32.totalorder %s66, %s67
      %p79 = scmp.eq.s32.totalorder %s24, 3
      %p80 = por %p78, %p79
      %p82 = scmp.ne.s32.totalorder %s67, %s81
      %p83 = scmp.eq.s32.totalorder %s24, 0
      %p84 = por %p82, %p83
      %s86 = sadd.s32 %s85, 1
      %p89 = scmp.eq.s32.totalorder %s18, 3
      %p90 = scmp.ne.s32.totalorder %s85, %s87
      %p91 = scmp.eq.s32.totalorder %s18, 0
      %p92 = por %p90, %p91
      %p93 = scmp.ne.s32.totalorder %s85, %s87
      %p94 = scmp.eq.s32.totalorder %s23, 3
      %p95 = por %p93, %p94
      %p96 = scmp.ne.s32.totalorder %s87, %s88
      %p97 = scmp.eq.s32.totalorder %s23, 0
      %p98 = por %p96, %p97
      %p99 = scmp.ne.s32.totalorder %s87, %s88
      %p100 = scmp.eq.s32.totalorder %s24, 3
      %p101 = por %p99, %p100
      %p103 = scmp.ne.s32.totalorder %s88, %s102
      %p104 = scmp.eq.s32.totalorder %s24, 0
      %p105 = por %p103, %p104
      %s106 = ssub.s32 %s26, %s33
      %p107 = scmp.eq.s32.totalorder %s106, 0
      %s109 = sadd.s32 %s108, 1
      %s110 = scalar_select %p107, %s108, %s109
      %p113 = pneg %p107
      %p114 = scmp.eq.s32.totalorder %s18, 3
      %p115 = por %p113, %p114
      %p116 = scmp.ne.s32.totalorder %s108, %s111
      %p117 = scmp.eq.s32.totalorder %s18, 0
      %p118 = por %p116, %p117
      %p119 = scmp.ne.s32.totalorder %s108, %s111
      %p120 = scmp.eq.s32.totalorder %s23, 3
      %p121 = por %p119, %p120
      %p122 = scmp.ne.s32.totalorder %s111, %s112
      %p123 = scmp.eq.s32.totalorder %s23, 0
      %p124 = por %p122, %p123
      %p125 = scmp.ne.s32.totalorder %s111, %s112
      %p126 = scmp.eq.s32.totalorder %s24, 3
      %p127 = por %p125, %p126
      %p129 = scmp.ne.s32.totalorder %s112, %s128
      %p130 = scmp.eq.s32.totalorder %s24, 0
      %p131 = por %p129, %p130
      %s132 = ssub.s32 %s26, %s33
      %p133 = scmp.eq.s32.totalorder %s132, 0
      %s135 = sadd.s32 %s134, 1
      %s136 = scalar_select %p133, %s134, %s135
      %p139 = pneg %p133
      %p140 = scmp.eq.s32.totalorder %s18, 3
      %p141 = por %p139, %p140
      %p142 = scmp.ne.s32.totalorder %s134, %s137
      %p143 = scmp.eq.s32.totalorder %s18, 0
      %p144 = por %p142, %p143
      %p145 = scmp.ne.s32.totalorder %s134, %s137
      %p146 = scmp.eq.s32.totalorder %s23, 3
      %p147 = por %p145, %p146
      %p148 = scmp.ne.s32.totalorder %s137, %s138
      %p149 = scmp.eq.s32.totalorder %s23, 0
      %p150 = por %p148, %p149
      %p151 = scmp.ne.s32.totalorder %s137, %s138
      %p152 = scmp.eq.s32.totalorder %s24, 3
      %p153 = por %p151, %p152
      %p155 = scmp.ne.s32.totalorder %s138, %s154
      %p156 = scmp.eq.s32.totalorder %s24, 0
      %p157 = por %p155, %p156
      %s158 = ssub.s32 %s26, %s33
      %p159 = scmp.eq.s32.totalorder %s158, 0
      %s161 = sadd.s32 %s160, 1
      %s162 = scalar_select %p159, %s160, %s161
      %p165 = pneg %p159
      %p166 = scmp.eq.s32.totalorder %s18, 3
      %p167 = por %p165, %p166
      %p168 = scmp.ne.s32.totalorder %s160, %s163
      %p169 = scmp.eq.s32.totalorder %s18, 0
      %p170 = por %p168, %p169
      %p171 = scmp.ne.s32.totalorder %s160, %s163
      %p172 = scmp.eq.s32.totalorder %s23, 3
      %p173 = por %p171, %p172
      %p174 = scmp.ne.s32.totalorder %s163, %s164
      %p175 = scmp.eq.s32.totalorder %s23, 0
      %p176 = por %p174, %p175
      %p177 = scmp.ne.s32.totalorder %s163, %s164
      %p178 = scmp.eq.s32.totalorder %s24, 3
      %p179 = por %p177, %p178
      %p181 = scmp.ne.s32.totalorder %s164, %s180
      %p182 = scmp.eq.s32.totalorder %s24, 0
      %p183 = por %p181, %p182
      %s184 = ssub.s32 %s26, %s33
      %p185 = scmp.eq.s32.totalorder %s184, 0
      %s187 = sadd.s32 %s186, 1
      %s188 = scalar_select %p185, %s186, %s187
      %p191 = pneg %p185
      %p192 = scmp.eq.s32.totalorder %s18, 3
      %p193 = por %p191, %p192
      %p194 = scmp.ne.s32.totalorder %s186, %s189
      %p195 = scmp.eq.s32.totalorder %s18, 0
      %p196 = por %p194, %p195
      %p197 = scmp.ne.s32.totalorder %s186, %s189
      %p198 = scmp.eq.s32.totalorder %s23, 3
      %p199 = por %p197, %p198
      %p200 = scmp.ne.s32.totalorder %s189, %s190
      %p201 = scmp.eq.s32.totalorder %s23, 0
      %p202 = por %p200, %p201
      %p203 = scmp.ne.s32.totalorder %s189, %s190
      %p204 = scmp.eq.s32.totalorder %s24, 3
      %p205 = por %p203, %p204
      %p207 = scmp.ne.s32.totalorder %s190, %s206
      %p208 = scmp.eq.s32.totalorder %s24, 0
      %p209 = por %p207, %p208
      %s211 = sadd.s32 %s210, 1
      %p214 = scmp.eq.s32.totalorder %s18, 3
      %p215 = scmp.ne.s32.totalorder %s210, %s212
      %p216 = scmp.eq.s32.totalorder %s18, 0
      %p217 = por %p215, %p216
      %p218 = scmp.ne.s32.totalorder %s210, %s212
      %p219 = scmp.eq.s32.totalorder %s23, 3
      %p220 = por %p218, %p219
      %p221 = scmp.ne.s32.totalorder %s212, %s213
      %p222 = scmp.eq.s32.totalorder %s23, 0
      %p223 = por %p221, %p222
      %p224 = scmp.ne.s32.totalorder %s212, %s213
      %p225 = scmp.eq.s32.totalorder %s24, 3
      %p226 = por %p224, %p225
      %p228 = scmp.ne.s32.totalorder %s213, %s227
      %p229 = scmp.eq.s32.totalorder %s24, 0
      %p230 = por %p228, %p229
      %s232 = sadd.s32 %s231, 1
      %p235 = scmp.eq.s32.totalorder %s18, 3
      %p236 = scmp.ne.s32.totalorder %s231, %s233
      %p237 = scmp.eq.s32.totalorder %s18, 0
      %p238 = por %p236, %p237
      %p239 = scmp.ne.s32.totalorder %s231, %s233
      %p240 = scmp.eq.s32.totalorder %s23, 3
      %p241 = por %p239, %p240
      %p242 = scmp.ne.s32.totalorder %s233, %s234
      %p243 = scmp.eq.s32.totalorder %s23, 0
      %p244 = por %p242, %p243
      %p245 = scmp.ne.s32.totalorder %s233, %s234
      %p246 = scmp.eq.s32.totalorder %s24, 3
      %p247 = por %p245, %p246
      %p249 = scmp.ne.s32.totalorder %s234, %s248
      %p250 = scmp.eq.s32.totalorder %s24, 0
      %p251 = por %p249, %p250
      %s252 = ssub.s32 %s25, %s37
      %p253 = scmp.eq.s32.totalorder %s252, 0
      %s255 = sadd.s32 %s254, 1
      %s256 = scalar_select %p253, %s254, %s255
      %p259 = pneg %p253
      %p260 = scmp.eq.s32.totalorder %s18, 3
      %p261 = por %p259, %p260
      %p262 = scmp.ne.s32.totalorder %s254, %s257
      %p263 = scmp.eq.s32.totalorder %s18, 0
      %p264 = por %p262, %p263
      %p265 = scmp.ne.s32.totalorder %s254, %s257
      %p266 = scmp.eq.s32.totalorder %s23, 3
      %p267 = por %p265, %p266
      %p268 = scmp.ne.s32.totalorder %s257, %s258
      %p269 = scmp.eq.s32.totalorder %s23, 0
      %p270 = por %p268, %p269
      %p271 = scmp.ne.s32.totalorder %s257, %s258
      %p272 = scmp.eq.s32.totalorder %s24, 3
      %p273 = por %p271, %p272
      %p275 = scmp.ne.s32.totalorder %s258, %s274
      %p276 = scmp.eq.s32.totalorder %s24, 0
      %p277 = por %p275, %p276
      %p278 = scmp.le.s32.totalorder 1, %s18
      %p279 = scmp.lt.s32.totalorder %s18, 5
      %p280 = pnand %p278, %p279
      %p281 = pneg %p280
      // Predicated region
      $region9: #{tpu_custom_call.1} parent=5 // pred_check
        _
      $region10: #{tpu_custom_call.1} parent=5 // pred_check_branch
        %283 = sbr.rel (%p280) target = $region12
      $region11: #{tpu_custom_call.1} parent=5 // pred_region
        %s284 = ssub.s32 %s18, 1
        // Predicated region
        $region13: #{tpu_custom_call.1} parent=11 // pred_check
          %p285 = pneg %p56
        $region14: #{tpu_custom_call.1} parent=11 // pred_check_branch
          %287 = sbr.rel (%p285) target = $region16
        $region15: #{tpu_custom_call.1} parent=11 // pred_region
          %s288 = smul.u32 2, %s27
          %s290 = ssub.s32 256, 256
          %291 = vsyncadd [#allocation5], %s290
          %s292 = smul.addr %s288, 128
          %s293 = scalar_lea.hbm %s0, %s292
          %s294 = sshll.u32 [#allocation4], 4
          %s295 = int_to_ptr.vmem [resolvable:$true] %s294
          %300 = dma.hbm_to_vmem [thread:$0]  %s293, 256, %s295, [#allocation5], 128, 128, 8
        $region16: #{tpu_custom_call.1} parent=11 // pred_fallthru
          _
        // Predicated region
        $region17: #{tpu_custom_call.1} parent=11 // pred_check
          %p301 = pneg %p77
        $region18: #{tpu_custom_call.1} parent=11 // pred_check_branch
          %303 = sbr.rel (%p301) target = $region20
        $region19: #{tpu_custom_call.1} parent=11 // pred_region
          %s305 = ssub.s32 2048, 2048
          %306 = vsyncadd [#allocation8], %s305
          %s307 = sshll.u32 [#allocation7], 4
          %s308 = int_to_ptr.vmem [resolvable:$true] %s307
          %313 = dma.hbm_to_vmem [thread:$0]  %s1, 2048, %s308, [#allocation8], 128, 128, 8
        $region20: #{tpu_custom_call.1} parent=11 // pred_fallthru
          _
        // Predicated region
        $region21: #{tpu_custom_call.1} parent=11 // pred_check
          %p314 = pneg %p98
        $region22: #{tpu_custom_call.1} parent=11 // pred_check_branch
          %316 = sbr.rel (%p314) target = $region24
        $region23: #{tpu_custom_call.1} parent=11 // pred_region
          _
        $region24: #{tpu_custom_call.1} parent=11 // pred_fallthru
          _
        // Predicated region
        $region25: #{tpu_custom_call.1} parent=11 // pred_check
          %p317 = pneg %p223
        $region26: #{tpu_custom_call.1} parent=11 // pred_check_branch
          %319 = sbr.rel (%p317) target = $region28
        $region27: #{tpu_custom_call.1} parent=11 // pred_region
          _
        $region28: #{tpu_custom_call.1} parent=11 // pred_fallthru
          _
        // Predicated region
        $region29: #{tpu_custom_call.1} parent=11 // pred_check
          %p320 = pneg %p244
        $region30: #{tpu_custom_call.1} parent=11 // pred_check_branch
          %322 = sbr.rel (%p320) target = $region32
        $region31: #{tpu_custom_call.1} parent=11 // pred_region
          _
        $region32: #{tpu_custom_call.1} parent=11 // pred_fallthru
          _
      $region12: #{tpu_custom_call.1} parent=5 // pred_fallthru
        _
      %p323 = scmp.lt.s32.totalorder %s18, 4
      // Predicated region
      $region33: #{tpu_custom_call.1} parent=5 // pred_check
        %p324 = pneg %p323
      $region34: #{tpu_custom_call.1} parent=5 // pred_check_branch
        %326 = sbr.rel (%p324) target = $region36
      $region35: #{tpu_custom_call.1} parent=5 // pred_region
        // Predicated region
        $region37: #{tpu_custom_call.1} parent=35 // pred_check
          %p327 = pneg %p118
        $region38: #{tpu_custom_call.1} parent=35 // pred_check_branch
          %329 = sbr.rel (%p327) target = $region40
        $region39: #{tpu_custom_call.1} parent=35 // pred_region
          %s330 = sand.u32 %s18, 1
          %s331 = scalar_lea.sflag [#allocation5], %s330
          %s332 = sand.u32 %s108, 1
          %s333 = smul.addr %s332, 128
          %s334 = scalar_lea.vmem [#allocation9], %s333
          %s336 = ssub.s32 2048, 2048
          %337 = vsyncadd %s331, %s336
          %s338 = smul.addr %s26, 16
          %s339 = smul.addr %s338, 128
          %s340 = scalar_lea.hbm %s3, %s339
          %s341 = sshll.u32 %s334, 4
          %s342 = int_to_ptr.vmem [resolvable:$true] %s341
          %347 = dma.hbm_to_vmem [thread:$0]  %s340, 2048, %s342, %s331, 128, 128, 8
        $region40: #{tpu_custom_call.1} parent=35 // pred_fallthru
          _
        // Predicated region
        $region41: #{tpu_custom_call.1} parent=35 // pred_check
          %p348 = pneg %p144
        $region42: #{tpu_custom_call.1} parent=35 // pred_check_branch
          %350 = sbr.rel (%p348) target = $region44
        $region43: #{tpu_custom_call.1} parent=35 // pred_region
          %p351 = scmp.lt.s32.totalorder %s26, 3
          %s352 = scalar_select %p351, %s26, 3
          %s353 = scalar_lea.vmem %s4, %s352
        $region44: #{tpu_custom_call.1} parent=35 // pred_fallthru
          _
        // Predicated region
        $region45: #{tpu_custom_call.1} parent=35 // pred_check
          %p354 = pneg %p170
        $region46: #{tpu_custom_call.1} parent=35 // pred_check_branch
          %356 = sbr.rel (%p354) target = $region48
        $region47: #{tpu_custom_call.1} parent=35 // pred_region
          %s357 = sand.u32 %s18, 1
          %s358 = scalar_lea.sflag [#allocation5], %s357
          %s359 = sand.u32 %s160, 1
          %s360 = smul.addr %s359, 128
          %s361 = scalar_lea.vmem [#allocation10], %s360
          %s363 = ssub.s32 2048, 2048
          %364 = vsyncadd %s358, %s363
          %s365 = smul.addr %s26, 16
          %s366 = smul.addr %s365, 128
          %s367 = scalar_lea.hbm %s5, %s366
          %s368 = sshll.u32 %s361, 4
          %s369 = int_to_ptr.vmem [resolvable:$true] %s368
          %374 = dma.hbm_to_vmem [thread:$0]  %s367, 2048, %s369, %s358, 128, 128, 8
        $region48: #{tpu_custom_call.1} parent=35 // pred_fallthru
          _
        // Predicated region
        $region49: #{tpu_custom_call.1} parent=35 // pred_check
          %p375 = pneg %p196
        $region50: #{tpu_custom_call.1} parent=35 // pred_check_branch
          %377 = sbr.rel (%p375) target = $region52
        $region51: #{tpu_custom_call.1} parent=35 // pred_region
          %p378 = scmp.lt.s32.totalorder %s26, 3
          %s379 = scalar_select %p378, %s26, 3
          %s380 = scalar_lea.vmem %s6, %s379
        $region52: #{tpu_custom_call.1} parent=35 // pred_fallthru
          _
      $region36: #{tpu_custom_call.1} parent=5 // pred_fallthru
        _
      %p381 = scmp.le.s32.totalorder 1, %s18
      %p382 = scmp.lt.s32.totalorder %s18, 5
      %p383 = pnand %p381, %p382
      %p384 = pneg %p383
      // Predicated region
      $region53: #{tpu_custom_call.1} parent=5 // pred_check
        _
      $region54: #{tpu_custom_call.1} parent=5 // pred_check_branch
        %386 = sbr.rel (%p383) target = $region56
      $region55: #{tpu_custom_call.1} parent=5 // pred_region
        %s387 = ssub.s32 %s18, 1
        // Predicated region
        $region57: #{tpu_custom_call.1} parent=55 // pred_check
          %p388 = pneg %p56
        $region58: #{tpu_custom_call.1} parent=55 // pred_check_branch
          %390 = sbr.rel (%p388) target = $region60
        $region59: #{tpu_custom_call.1} parent=55 // pred_region
          %391 = dma.done [#allocation5], 256
        $region60: #{tpu_custom_call.1} parent=55 // pred_fallthru
          _
        // Predicated region
        $region61: #{tpu_custom_call.1} parent=55 // pred_check
          %p392 = pneg %p77
        $region62: #{tpu_custom_call.1} parent=55 // pred_check_branch
          %394 = sbr.rel (%p392) target = $region64
        $region63: #{tpu_custom_call.1} parent=55 // pred_region
          %395 = dma.done [#allocation8], 2048
        $region64: #{tpu_custom_call.1} parent=55 // pred_fallthru
          _
        %s396 = sand.u32 %s23, 1
        %s397 = scalar_lea.sflag [#allocation5], %s396
        %s398 = sand.u32 %s111, 1
        %s399 = smul.addr %s398, 128
        %s400 = scalar_lea.vmem [#allocation9], %s399
        // Predicated region
        $region65: #{tpu_custom_call.1} parent=55 // pred_check
          %p401 = pneg %p124
        $region66: #{tpu_custom_call.1} parent=55 // pred_check_branch
          %403 = sbr.rel (%p401) target = $region68
        $region67: #{tpu_custom_call.1} parent=55 // pred_region
          %404 = dma.done %s397, 2048
        $region68: #{tpu_custom_call.1} parent=55 // pred_fallthru
          _
        %s405 = sand.u32 %s23, 1
        %s406 = scalar_lea.sflag [#allocation5], %s405
        %s407 = sand.u32 %s163, 1
        %s408 = smul.addr %s407, 128
        %s409 = scalar_lea.vmem [#allocation10], %s408
        // Predicated region
        $region69: #{tpu_custom_call.1} parent=55 // pred_check
          %p410 = pneg %p176
        $region70: #{tpu_custom_call.1} parent=55 // pred_check_branch
          %412 = sbr.rel (%p410) target = $region72
        $region71: #{tpu_custom_call.1} parent=55 // pred_region
          %413 = dma.done %s406, 2048
        $region72: #{tpu_custom_call.1} parent=55 // pred_fallthru
          _
        %p414 = pneg %p56
        %p415 = pneg %p53
        %p416 = pneg %p77
        %p417 = pneg %p74
        %p418 = pneg %p98
        %p419 = pneg %p95
        %s420 = sand.u32 %s23, 1
        %s421 = scalar_lea.sflag [#allocation5], %s420
        %s422 = sand.u32 %s111, 1
        %s423 = smul.addr %s422, 128
        %s424 = scalar_lea.vmem [#allocation9], %s423
        %p425 = pneg %p124
        %p426 = pneg %p121
        %p427 = scmp.lt.s32.totalorder %s28, 3
        %s428 = scalar_select %p427, %s28, 3
        %s429 = scalar_lea.vmem %s4, %s428
        %p430 = pneg %p150
        %p431 = pneg %p147
        %s432 = sand.u32 %s23, 1
        %s433 = scalar_lea.sflag [#allocation5], %s432
        %s434 = sand.u32 %s163, 1
        %s435 = smul.addr %s434, 128
        %s436 = scalar_lea.vmem [#allocation10], %s435
        %p437 = pneg %p176
        %p438 = pneg %p173
        %p439 = scmp.lt.s32.totalorder %s28, 3
        %s440 = scalar_select %p439, %s28, 3
        %s441 = scalar_lea.vmem %s6, %s440
        %p442 = pneg %p202
        %p443 = pneg %p199
        %p444 = pneg %p223
        %p445 = pneg %p220
        %p446 = pneg %p244
        %p447 = pneg %p241
        %p448 = pneg %p270
        %p449 = pneg %p267
        %s450 = smul.u32 2, %s27
        %p451 = scmp.lt.s32.totalorder %s28, 3
        %s452 = scalar_select %p451, %s28, 3
        %s453 = scalar_lea.vmem %s4, %s452
        %p454 = scmp.lt.s32.totalorder %s28, 3
        %s455 = scalar_select %p454, %s28, 3
        %s456 = scalar_lea.vmem %s6, %s455
        %s457 = smul.u32 2, %s27
        %p458 = scmp.eq.s32.totalorder %s28, 0
        // Predicated region
        $region73: #{tpu_custom_call.1} parent=55 // pred_check
          %p459 = pneg %p458
        $region74: #{tpu_custom_call.1} parent=55 // pred_check_branch
          %461 = sbr.rel (%p459) target = $region76
        $region75: #{tpu_custom_call.1} parent=55 // pred_region
          %v462 = vld [vmem:[#allocation4] sm:$0xff]
          %v463 = vld [vmem:[#allocation4 + $0x8] sm:$0xff]
          %v464 = vld [vmem:[#allocation7] sm:$0xff]
          %v465 = vld [vmem:[#allocation7 + $0x8] sm:$0xff]
          %v466 = vld [vmem:[#allocation7 + $0x10] sm:$0xff]
          %v467 = vld [vmem:[#allocation7 + $0x18] sm:$0xff]
          %v468 = vld [vmem:[#allocation7 + $0x20] sm:$0xff]
          %v469 = vld [vmem:[#allocation7 + $0x28] sm:$0xff]
          %v470 = vld [vmem:[#allocation7 + $0x30] sm:$0xff]
          %v471 = vld [vmem:[#allocation7 + $0x38] sm:$0xff]
          %v472 = vld [vmem:[#allocation7 + $0x40] sm:$0xff]
          %v473 = vld [vmem:[#allocation7 + $0x48] sm:$0xff]
          %v474 = vld [vmem:[#allocation7 + $0x50] sm:$0xff]
          %v475 = vld [vmem:[#allocation7 + $0x58] sm:$0xff]
          %v476 = vld [vmem:[#allocation7 + $0x60] sm:$0xff]
          %v477 = vld [vmem:[#allocation7 + $0x68] sm:$0xff]
          %v478 = vld [vmem:[#allocation7 + $0x70] sm:$0xff]
          %v479 = vld [vmem:[#allocation7 + $0x78] sm:$0xff]
          %v480 = vld [vmem:[%s2] sm:$0x1]
          %v482 = vlaneseq
          %v483 = vshrl.u32 %v482, 7
          %v484 = vsub.s32 0, %v483
          %v485 = vrot.slane %v480, %v484
          %487 = vmatprep.subr.mxu0 0.0
          %488 = vmatpush1.msra.mxu0 %v464
          %489 = vmatprep.subr.mxu0 0.0
          %490 = vmatpush1.msra.mxu0 %v465
          %491 = vmatprep.subr.mxu0 0.0
          %492 = vmatpush1.msra.mxu0 %v466
          %493 = vmatprep.subr.mxu0 0.0
          %494 = vmatpush1.msra.mxu0 %v467
          %495 = vmatprep.subr.mxu0 0.0
          %496 = vmatpush1.msra.mxu0 %v468
          %497 = vmatprep.subr.mxu0 0.0
          %498 = vmatpush1.msra.mxu0 %v469
          %499 = vmatprep.subr.mxu0 0.0
          %500 = vmatpush1.msra.mxu0 %v470
          %501 = vmatprep.subr.mxu0 0.0
          %502 = vmatpush1.msra.mxu0 %v471
          %503 = vmatprep.subr.mxu0 0.0
          %504 = vmatpush1.msra.mxu0 %v472
          %505 = vmatprep.subr.mxu0 0.0
          %506 = vmatpush1.msra.mxu0 %v473
          %507 = vmatprep.subr.mxu0 0.0
          %508 = vmatpush1.msra.mxu0 %v474
          %509 = vmatprep.subr.mxu0 0.0
          %510 = vmatpush1.msra.mxu0 %v475
          %511 = vmatprep.subr.mxu0 0.0
          %512 = vmatpush1.msra.mxu0 %v476
          %513 = vmatprep.subr.mxu0 0.0
          %514 = vmatpush1.msra.mxu0 %v477
          %515 = vmatprep.subr.mxu0 0.0
          %516 = vmatpush1.msra.mxu0 %v478
          %517 = vmatprep.subr.mxu0 0.0
          %518 = vmatpush1.msra.mxu0 %v479
          %519 = vmatprep.subr.mxu0 0.0
          %520 = vmatpush1.msra.mxu0 0.0
          %521 = vmatprep.subr.mxu0 0.0
          %522 = vmatpush1.msra.mxu0 0.0
          %523 = vmatprep.subr.mxu0 0.0
          %524 = vmatpush1.msra.mxu0 0.0
          %525 = vmatprep.subr.mxu0 0.0
          %526 = vmatpush1.msra.mxu0 0.0
          %527 = vmatprep.subr.mxu0 0.0
          %528 = vmatpush1.msra.mxu0 0.0
          %529 = vmatprep.subr.mxu0 0.0
          %530 = vmatpush1.msra.mxu0 0.0
          %531 = vmatprep.subr.mxu0 0.0
          %532 = vmatpush1.msra.mxu0 0.0
          %533 = vmatprep.subr.mxu0 0.0
          %534 = vmatpush1.msra.mxu0 0.0
          %535 = vmatprep.subr.mxu0 0.0
          %536 = vmatpush1.msra.mxu0 0.0
          %537 = vmatprep.subr.mxu0 0.0
          %538 = vmatpush1.msra.mxu0 0.0
          %539 = vmatprep.subr.mxu0 0.0
          %540 = vmatpush1.msra.mxu0 0.0
          %541 = vmatprep.subr.mxu0 0.0
          %542 = vmatpush1.msra.mxu0 0.0
          %543 = vmatprep.subr.mxu0 0.0
          %544 = vmatpush1.msra.mxu0 0.0
          %545 = vmatprep.subr.mxu0 0.0
          %546 = vmatpush1.msra.mxu0 0.0
          %547 = vmatprep.subr.mxu0 0.0
          %548 = vmatpush1.msra.mxu0 0.0
          %549 = vmatprep.subr.mxu0 0.0
          %550 = vmatpush1.msra.mxu0 0.0
          %551 = vmatprep.mubr.f32.mxu0 0.0
          %552 = vmatmul.mubr.f32.gmra.mrb[0].mxu0 %v462
          %v553 = vpop.f32.mrb[0].mxu0
          %v554 = vadd.f32 %v485, %v553
          %v555 = vpop.f32.mrb[0].mxu0
          %556 = vmatprep.mubr.f32.mxu0 0.0
          %557 = vmatmul.mubr.f32.gmra.mrb[0].mxu0 %v463
          %v558 = vpop.f32.mrb[0].mxu0
          %v559 = vadd.f32 %v485, %v558
          %v560 = vpop.f32.mrb[0].mxu0
          %561 = vdwg.mxu0
          %562 = vmax.xlane.f32.xlu0 %v554
          %v563 = vpop.xlane.xlu0 %562
          %564 = vmax.xlane.f32.xlu0 %v559
          %v565 = vpop.xlane.xlu0 %564
          %v566 = vsub.f32 %v554, %v563
          %v567 = vsub.f32 %v559, %v565
          %v568 = vmul.f32 %v566, 1.442695
          %v569 = vpow.pop %v568
          %v570 = vmul.f32 %v567, 1.442695
          %v571 = vpow.pop %v570
          %572 = vadd.xlane.f32.xlu0 %v569
          %v573 = vpop.xlane.xlu0 %572
          %574 = vadd.xlane.f32.xlu0 %v571
          %v575 = vpop.xlane.xlu0 %574
          %v576 = vrcp.pop %v573
          %v577 = vmul.f32 %v569, %v576
          %v578 = vrcp.pop %v575
          %v579 = vmul.f32 %v571, %v578
          %580 = vst [vmem:[#allocation3] sm:$0xff] %v577
          %581 = vst [vmem:[#allocation3 + $0x8] sm:$0xff] %v579
          %582 = vst [vmem:[#allocation2] sm:$0xff] 0.0
          %583 = vst [vmem:[#allocation2 + $0x8] sm:$0xff] 0.0
        $region76: #{tpu_custom_call.1} parent=55 // pred_fallthru
          _
        %v584 = vlaneseq
        %v585 = vand.u32 %v584, 127
        %v586 = vstv %s28
        %vm587 = vcmp.eq.s32.totalorder %v585, %v586
        %v588 = vld [vmem:[#allocation3] sm:$0xff]
        %v589 = vld [vmem:[#allocation3 + $0x8] sm:$0xff]
        %v590 = vsel %vm587, %v588, 0.0
        %v591 = vsel %vm587, %v589, 0.0
        %592 = vadd.xlane.f32.xlu0 %v590
        %v593 = vpop.xlane.xlu0 %592
        %594 = vadd.xlane.f32.xlu0 %v591
        %v595 = vpop.xlane.xlu0 %594
        %v596 = vld [vmem:[#allocation4] sm:$0xff]
        %v597 = vld [vmem:[#allocation4 + $0x8] sm:$0xff]
        %v598 = vld [vmem:[%s400] sm:$0xff]
        %v599 = vld [vmem:[%s400 + $0x8] sm:$0xff]
        %v600 = vld [vmem:[%s400 + $0x10] sm:$0xff]
        %v601 = vld [vmem:[%s400 + $0x18] sm:$0xff]
        %v602 = vld [vmem:[%s400 + $0x20] sm:$0xff]
        %v603 = vld [vmem:[%s400 + $0x28] sm:$0xff]
        %v604 = vld [vmem:[%s400 + $0x30] sm:$0xff]
        %v605 = vld [vmem:[%s400 + $0x38] sm:$0xff]
        %v606 = vld [vmem:[%s400 + $0x40] sm:$0xff]
        %v607 = vld [vmem:[%s400 + $0x48] sm:$0xff]
        %v608 = vld [vmem:[%s400 + $0x50] sm:$0xff]
        %v609 = vld [vmem:[%s400 + $0x58] sm:$0xff]
        %v610 = vld [vmem:[%s400 + $0x60] sm:$0xff]
        %v611 = vld [vmem:[%s400 + $0x68] sm:$0xff]
        %v612 = vld [vmem:[%s400 + $0x70] sm:$0xff]
        %v613 = vld [vmem:[%s400 + $0x78] sm:$0xff]
        %v614 = vld [vmem:[%s453] sm:$0x1]
        %v616 = vlaneseq
        %v617 = vshrl.u32 %v616, 7
        %v618 = vsub.s32 0, %v617
        %v619 = vrot.slane %v614, %v618
        %621 = vmatprep.subr.mxu0 0.0
        %622 = vmatpush1.msra.mxu0 %v598
        %623 = vmatprep.subr.mxu0 0.0
        %624 = vmatpush1.msra.mxu0 %v599
        %625 = vmatprep.subr.mxu0 0.0
        %626 = vmatpush1.msra.mxu0 %v600
        %627 = vmatprep.subr.mxu0 0.0
        %628 = vmatpush1.msra.mxu0 %v601
        %629 = vmatprep.subr.mxu0 0.0
        %630 = vmatpush1.msra.mxu0 %v602
        %631 = vmatprep.subr.mxu0 0.0
        %632 = vmatpush1.msra.mxu0 %v603
        %633 = vmatprep.subr.mxu0 0.0
        %634 = vmatpush1.msra.mxu0 %v604
        %635 = vmatprep.subr.mxu0 0.0
        %636 = vmatpush1.msra.mxu0 %v605
        %637 = vmatprep.subr.mxu0 0.0
        %638 = vmatpush1.msra.mxu0 %v606
        %639 = vmatprep.subr.mxu0 0.0
        %640 = vmatpush1.msra.mxu0 %v607
        %641 = vmatprep.subr.mxu0 0.0
        %642 = vmatpush1.msra.mxu0 %v608
        %643 = vmatprep.subr.mxu0 0.0
        %644 = vmatpush1.msra.mxu0 %v609
        %645 = vmatprep.subr.mxu0 0.0
        %646 = vmatpush1.msra.mxu0 %v610
        %647 = vmatprep.subr.mxu0 0.0
        %648 = vmatpush1.msra.mxu0 %v611
        %649 = vmatprep.subr.mxu0 0.0
        %650 = vmatpush1.msra.mxu0 %v612
        %651 = vmatprep.subr.mxu0 0.0
        %652 = vmatpush1.msra.mxu0 %v613
        %653 = vmatprep.subr.mxu0 0.0
        %654 = vmatpush1.msra.mxu0 0.0
        %655 = vmatprep.subr.mxu0 0.0
        %656 = vmatpush1.msra.mxu0 0.0
        %657 = vmatprep.subr.mxu0 0.0
        %658 = vmatpush1.msra.mxu0 0.0
        %659 = vmatprep.subr.mxu0 0.0
        %660 = vmatpush1.msra.mxu0 0.0
        %661 = vmatprep.subr.mxu0 0.0
        %662 = vmatpush1.msra.mxu0 0.0
        %663 = vmatprep.subr.mxu0 0.0
        %664 = vmatpush1.msra.mxu0 0.0
        %665 = vmatprep.subr.mxu0 0.0
        %666 = vmatpush1.msra.mxu0 0.0
        %667 = vmatprep.subr.mxu0 0.0
        %668 = vmatpush1.msra.mxu0 0.0
        %669 = vmatprep.subr.mxu0 0.0
        %670 = vmatpush1.msra.mxu0 0.0
        %671 = vmatprep.subr.mxu0 0.0
        %672 = vmatpush1.msra.mxu0 0.0
        %673 = vmatprep.subr.mxu0 0.0
        %674 = vmatpush1.msra.mxu0 0.0
        %675 = vmatprep.subr.mxu0 0.0
        %676 = vmatpush1.msra.mxu0 0.0
        %677 = vmatprep.subr.mxu0 0.0
        %678 = vmatpush1.msra.mxu0 0.0
        %679 = vmatprep.subr.mxu0 0.0
        %680 = vmatpush1.msra.mxu0 0.0
        %681 = vmatprep.subr.mxu0 0.0
        %682 = vmatpush1.msra.mxu0 0.0
        %683 = vmatprep.subr.mxu0 0.0
        %684 = vmatpush1.msra.mxu0 0.0
        %685 = vmatprep.mubr.f32.mxu0 0.0
        %686 = vmatmul.mubr.f32.gmra.mrb[0].mxu0 %v596
        %v687 = vpop.f32.mrb[0].mxu0
        %v688 = vadd.f32 %v619, %v687
        %v689 = vpop.f32.mrb[0].mxu0
        %690 = vmatprep.mubr.f32.mxu0 0.0
        %691 = vmatmul.mubr.f32.gmra.mrb[0].mxu0 %v597
        %v692 = vpop.f32.mrb[0].mxu0
        %v693 = vadd.f32 %v619, %v692
        %v694 = vpop.f32.mrb[0].mxu0
        %695 = vdwg.mxu0
        %v696 = vmul.f32 %v688, 0.5
        %v697 = vmul.f32 %v693, 0.5
        %v698 = vmul.f32 %v688, 0.70710677
        %v699 = vmul.f32 %v693, 0.70710677
        %v700 = vand.u32 2147483647, %v698
        %v701 = vand.u32 2147483647, %v699
        %v702 = vmul.f32 %v700, 0.3275911
        %v703 = vmul.f32 %v701, 0.3275911
        %v704 = vadd.f32 %v702, 1.0
        %v705 = vadd.f32 %v703, 1.0
        %v706 = vrcp.pop %v704
        %v707 = vmul.f32 1.0, %v706
        %v708 = vrcp.pop %v705
        %v709 = vmul.f32 1.0, %v708
        %v710 = vmul.f32 %v707, 1.0614054
        %v711 = vmul.f32 %v709, 1.0614054
        %v712 = vadd.f32 %v710, -1.4531521
        %v713 = vadd.f32 %v711, -1.4531521
        %v714 = vmul.f32 %v712, %v707
        %v715 = vmul.f32 %v713, %v709
        %v716 = vadd.f32 %v714, 1.4214138
        %v717 = vadd.f32 %v715, 1.4214138
        %v718 = vmul.f32 %v716, %v707
        %v719 = vmul.f32 %v717, %v709
        %v720 = vadd.f32 %v718, -0.28449672
        %v721 = vadd.f32 %v719, -0.28449672
        %v722 = vmul.f32 %v720, %v707
        %v723 = vmul.f32 %v721, %v709
        %v724 = vadd.f32 %v722, 0.2548296
        %v725 = vadd.f32 %v723, 0.2548296
        %v726 = vmul.f32 %v724, %v707
        %v727 = vmul.f32 %v725, %v709
        %v728 = vmul.f32 %v700, %v700
        %v729 = vmul.f32 %v701, %v701
        %v730 = vsub.f32 0.0, %v728
        %v731 = vsub.f32 0.0, %v729
        %v732 = vmul.f32 %v730, 1.442695
        %v733 = vpow.pop %v732
        %v734 = vmul.f32 %v731, 1.442695
        %v735 = vpow.pop %v734
        %v736 = vmul.f32 %v726, %v733
        %v737 = vmul.f32 %v727, %v735
        %v738 = vsub.f32 1.0, %v736
        %v739 = vsub.f32 1.0, %v737
        %vm740 = vcmp.ge.f32.partialorder %v698, 0.0
        %vm741 = vcmp.ge.f32.partialorder %v699, 0.0
        %v742 = vsub.f32 0.0, %v738
        %v743 = vsub.f32 0.0, %v739
        %v744 = vsel %vm740, %v738, %v742
        %v745 = vsel %vm741, %v739, %v743
        %v746 = vadd.f32 %v744, 1.0
        %v747 = vadd.f32 %v745, 1.0
        %v748 = vmul.f32 %v696, %v746
        %v749 = vmul.f32 %v697, %v747
        %v750 = vmul.f32 %v748, %v593
        %v751 = vmul.f32 %v749, %v595
        %v752 = vld [vmem:[#allocation2] sm:$0xff]
        %v753 = vld [vmem:[#allocation2 + $0x8] sm:$0xff]
        %v754 = vld [vmem:[%s409] sm:$0xff]
        %v755 = vld [vmem:[%s409 + $0x8] sm:$0xff]
        %v756 = vld [vmem:[%s409 + $0x10] sm:$0xff]
        %v757 = vld [vmem:[%s409 + $0x18] sm:$0xff]
        %v758 = vld [vmem:[%s409 + $0x20] sm:$0xff]
        %v759 = vld [vmem:[%s409 + $0x28] sm:$0xff]
        %v760 = vld [vmem:[%s409 + $0x30] sm:$0xff]
        %v761 = vld [vmem:[%s409 + $0x38] sm:$0xff]
        %v762 = vld [vmem:[%s409 + $0x40] sm:$0xff]
        %v763 = vld [vmem:[%s409 + $0x48] sm:$0xff]
        %v764 = vld [vmem:[%s409 + $0x50] sm:$0xff]
        %v765 = vld [vmem:[%s409 + $0x58] sm:$0xff]
        %v766 = vld [vmem:[%s409 + $0x60] sm:$0xff]
        %v767 = vld [vmem:[%s409 + $0x68] sm:$0xff]
        %v768 = vld [vmem:[%s409 + $0x70] sm:$0xff]
        %v769 = vld [vmem:[%s409 + $0x78] sm:$0xff]
        %v770 = vld [vmem:[%s456] sm:$0x1]
        %v772 = vlaneseq
        %v773 = vshrl.u32 %v772, 7
        %v774 = vsub.s32 0, %v773
        %v775 = vrot.slane %v770, %v774
        %v777 = vmul.f32 %v593, %v775
        %v778 = vmul.f32 %v595, %v775
        %779 = vmatprep.subr.mxu0 0.0
        %780 = vmatpush1.msra.mxu0 %v754
        %781 = vmatprep.subr.mxu0 0.0
        %782 = vmatpush1.msra.mxu0 %v755
        %783 = vmatprep.subr.mxu0 0.0
        %784 = vmatpush1.msra.mxu0 %v756
        %785 = vmatprep.subr.mxu0 0.0
        %786 = vmatpush1.msra.mxu0 %v757
        %787 = vmatprep.subr.mxu0 0.0
        %788 = vmatpush1.msra.mxu0 %v758
        %789 = vmatprep.subr.mxu0 0.0
        %790 = vmatpush1.msra.mxu0 %v759
        %791 = vmatprep.subr.mxu0 0.0
        %792 = vmatpush1.msra.mxu0 %v760
        %793 = vmatprep.subr.mxu0 0.0
        %794 = vmatpush1.msra.mxu0 %v761
        %795 = vmatprep.subr.mxu0 0.0
        %796 = vmatpush1.msra.mxu0 %v762
        %797 = vmatprep.subr.mxu0 0.0
        %798 = vmatpush1.msra.mxu0 %v763
        %799 = vmatprep.subr.mxu0 0.0
        %800 = vmatpush1.msra.mxu0 %v764
        %801 = vmatprep.subr.mxu0 0.0
        %802 = vmatpush1.msra.mxu0 %v765
        %803 = vmatprep.subr.mxu0 0.0
        %804 = vmatpush1.msra.mxu0 %v766
        %805 = vmatprep.subr.mxu0 0.0
        %806 = vmatpush1.msra.mxu0 %v767
        %807 = vmatprep.subr.mxu0 0.0
        %808 = vmatpush1.msra.mxu0 %v768
        %809 = vmatprep.subr.mxu0 0.0
        %810 = vmatpush1.msra.mxu0 %v769
        %811 = vmatprep.subr.mxu0 0.0
        %812 = vmatpush1.msra.mxu0 0.0
        %813 = vmatprep.subr.mxu0 0.0
        %814 = vmatpush1.msra.mxu0 0.0
        %815 = vmatprep.subr.mxu0 0.0
        %816 = vmatpush1.msra.mxu0 0.0
        %817 = vmatprep.subr.mxu0 0.0
        %818 = vmatpush1.msra.mxu0 0.0
        %819 = vmatprep.subr.mxu0 0.0
        %820 = vmatpush1.msra.mxu0 0.0
        %821 = vmatprep.subr.mxu0 0.0
        %822 = vmatpush1.msra.mxu0 0.0
        %823 = vmatprep.subr.mxu0 0.0
        %824 = vmatpush1.msra.mxu0 0.0
        %825 = vmatprep.subr.mxu0 0.0
        %826 = vmatpush1.msra.mxu0 0.0
        %827 = vmatprep.subr.mxu0 0.0
        %828 = vmatpush1.msra.mxu0 0.0
        %829 = vmatprep.subr.mxu0 0.0
        %830 = vmatpush1.msra.mxu0 0.0
        %831 = vmatprep.subr.mxu0 0.0
        %832 = vmatpush1.msra.mxu0 0.0
        %833 = vmatprep.subr.mxu0 0.0
        %834 = vmatpush1.msra.mxu0 0.0
        %835 = vmatprep.subr.mxu0 0.0
        %836 = vmatpush1.msra.mxu0 0.0
        %837 = vmatprep.subr.mxu0 0.0
        %838 = vmatpush1.msra.mxu0 0.0
        %839 = vmatprep.subr.mxu0 0.0
        %840 = vmatpush1.msra.mxu0 0.0
        %841 = vmatprep.subr.mxu0 0.0
        %842 = vmatpush1.msra.mxu0 0.0
        %843 = vmatprep.mubr.f32.mxu0 0.0
        %844 = vmatmul.mubr.f32.gmra.mrb[0].mxu0 %v750
        %v845 = vpop.f32.mrb[0].mxu0
        %v846 = vadd.f32 %v777, %v845
        %v847 = vpop.f32.mrb[0].mxu0
        %848 = vmatprep.mubr.f32.mxu0 0.0
        %849 = vmatmul.mubr.f32.gmra.mrb[0].mxu0 %v751
        %v850 = vpop.f32.mrb[0].mxu0
        %v851 = vadd.f32 %v778, %v850
        %v852 = vpop.f32.mrb[0].mxu0
        %853 = vdwg.mxu0
        %v854 = vadd.f32 %v752, %v846
        %v855 = vadd.f32 %v753, %v851
        %856 = vst [vmem:[#allocation2] sm:$0xff] %v854
        %857 = vst [vmem:[#allocation2 + $0x8] sm:$0xff] %v855
        %p858 = scmp.eq.s32.totalorder %s28, 3
        // Predicated region
        $region77: #{tpu_custom_call.1} parent=55 // pred_check
          %p859 = pneg %p858
        $region78: #{tpu_custom_call.1} parent=55 // pred_check_branch
          %861 = sbr.rel (%p859) target = $region80
        $region79: #{tpu_custom_call.1} parent=55 // pred_region
          %v862 = vld [vmem:[#allocation2] sm:$0xff]
          %v863 = vld [vmem:[#allocation2 + $0x8] sm:$0xff]
          %v864 = vld [vmem:[#allocation4] sm:$0xff]
          %v865 = vld [vmem:[#allocation4 + $0x8] sm:$0xff]
          %v866 = vadd.f32 %v862, %v864
          %v867 = vadd.f32 %v863, %v865
          %868 = vadd.xlane.f32.xlu0 %v866
          %v869 = vpop.xlane.xlu0 %868
          %870 = vadd.xlane.f32.xlu0 %v867
          %v871 = vpop.xlane.xlu0 %870
          %v872 = vmul.f32 %v869, 0.03125
          %v873 = vmul.f32 %v871, 0.03125
          %vm874 = vcmp.lt.s32.totalorder %v585, 32
          %v875 = vsub.f32 %v866, %v872
          %v876 = vsub.f32 %v867, %v873
          %v877 = vsel %vm874, %v875, 0.0
          %v878 = vsel %vm874, %v876, 0.0
          %v879 = vmul.f32 %v877, %v877
          %v880 = vmul.f32 %v878, %v878
          %881 = vadd.xlane.f32.xlu0 %v879
          %v882 = vpop.xlane.xlu0 %881
          %883 = vadd.xlane.f32.xlu0 %v880
          %v884 = vpop.xlane.xlu0 %883
          %v885 = vmul.f32 %v882, 0.03125
          %v886 = vmul.f32 %v884, 0.03125
          %v887 = vadd.f32 %v885, 1e-12
          %v888 = vadd.f32 %v886, 1e-12
          %v889 = vrsqrt.pop %v887
          %v890 = vrsqrt.pop %v888
          %v891 = vmul.f32 %v875, %v889
          %v892 = vmul.f32 %v876, %v890
          %v893 = vld [vmem:[%s7] sm:$0x1]
          %v895 = vlaneseq
          %v896 = vshrl.u32 %v895, 7
          %v897 = vsub.s32 0, %v896
          %v898 = vrot.slane %v893, %v897
          %v900 = vmul.f32 %v891, %v898
          %v901 = vmul.f32 %v892, %v898
          %v902 = vld [vmem:[%s8] sm:$0x1]
          %v904 = vlaneseq
          %v905 = vshrl.u32 %v904, 7
          %v906 = vsub.s32 0, %v905
          %v907 = vrot.slane %v902, %v906
          %v909 = vadd.f32 %v900, %v907
          %v910 = vadd.f32 %v901, %v907
          %911 = vst [vmem:[#allocation11] sm:$0xff] %v909
          %912 = vst [vmem:[#allocation11 + $0x8] sm:$0xff] %v910
        $region80: #{tpu_custom_call.1} parent=55 // pred_fallthru
          _
        // Predicated region
        $region81: #{tpu_custom_call.1} parent=55 // pred_check
          %p913 = pneg %p267
        $region82: #{tpu_custom_call.1} parent=55 // pred_check_branch
          %915 = sbr.rel (%p913) target = $region84
        $region83: #{tpu_custom_call.1} parent=55 // pred_region
          %s916 = smul.u32 2, %s27
          %s918 = ssub.s32 256, 256
          %919 = vsyncadd [#allocation6], %s918
          %s920 = smul.addr %s916, 128
          %s921 = scalar_lea.hbm %s9, %s920
          %s922 = sshll.u32 [#allocation11], 4
          %s923 = int_to_ptr.vmem [resolvable:$true] %s922
          %928 = dma.vmem_to_hbm [thread:$0]  %s923, 256, %s921, [#allocation6], 128, 128, 8
        $region84: #{tpu_custom_call.1} parent=55 // pred_fallthru
          _
        // Predicated region
        $region85: #{tpu_custom_call.1} parent=55 // pred_check
          %p929 = pneg %p267
        $region86: #{tpu_custom_call.1} parent=55 // pred_check_branch
          %931 = sbr.rel (%p929) target = $region88
        $region87: #{tpu_custom_call.1} parent=55 // pred_region
          %932 = dma.done [#allocation6], 256
        $region88: #{tpu_custom_call.1} parent=55 // pred_fallthru
          _
      $region56: #{tpu_custom_call.1} parent=5 // pred_fallthru
        _
      %p933 = scmp.le.s32.totalorder 2, %s18
      // Predicated region
      $region89: #{tpu_custom_call.1} parent=5 // pred_check
        %p934 = pneg %p933
      $region90: #{tpu_custom_call.1} parent=5 // pred_check_branch
        %936 = sbr.rel (%p934) target = $region92
      $region91: #{tpu_custom_call.1} parent=5 // pred_region
        %s937 = ssub.s32 %s18, 2
      $region92: #{tpu_custom_call.1} parent=5 // pred_fallthru
        _
    $region6: #{tpu_custom_call.1} parent=1 // loop_footer
      %s22 = sadd.s32 1, %s18
    $region7: #{tpu_custom_call.1} parent=1 // loop_footer_branch
      %17 = sbr.rel target = $region3
    $region8: #{tpu_custom_call.1} parent=1 // loop_exit
      _
    %938 = vsyncpa [#allocation5], 1
    %s939 = scalar_lea.sflag [#allocation5], 1
    %940 = vsyncpa %s939, 1
    %941 = vsyncpa [#allocation8], 1
    %942 = vsyncpa [#allocation6], 1
    %s943 = scalar_lea.sflag [#allocation6], 1
    %944 = vsyncpa %s943, 1

</llo_original>
